<compile_context>
chip_gen: v7x
topology: tpu7x:2x2x1
jax: 0.10.0
libtpu: 0.0.40
codegen_flags: <defaults>
</compile_context>

<pallas_src>
import jax
import jax.numpy as jnp
import numpy as np
from jax.experimental import pallas as pl
from jax.experimental.pallas import tpu as pltpu


# ---------- fused kernel: node-proj(gathered rows) + edge-proj + concat -------
def _fused_kernel(nsrc_ref, ef_ref, wn_ref, we_ref, b_ref, o_ref):
    # Both projections accumulate into one f32 (te, Dn+De) tile; the zero
    # columns of the block-diagonally packed weights make this an exact concat.
    acc = jnp.dot(nsrc_ref[...], wn_ref[...], preferred_element_type=jnp.float32)
    acc = acc + jnp.dot(ef_ref[...], we_ref[...], preferred_element_type=jnp.float32)
    o_ref[...] = (acc + b_ref[...]).astype(o_ref.dtype)


def fused_edge_init(src_node_feats, edge_feats, w_n_pad, w_e_pad, b_cat, *, te=1024):
    """out[e] = concat(src_node_feats[e] @ Wn + bn, edge_feats[e] @ We + be)."""
    E, Dn = src_node_feats.shape
    De = edge_feats.shape[1]
    Dout = Dn + De

    # Tile of edges: either the full array (small E) or a multiple of 8.
    te = min(te, E)
    if te < E:
        te = max(8, (te // 8) * 8)
    grid = (pl.cdiv(E, te),)          # partial last block handled by Pallas

    return pl.pallas_call(
        _fused_kernel,
        out_shape=jax.ShapeDtypeStruct((E, Dout), src_node_feats.dtype),
        grid=grid,
        in_specs=[
            pl.BlockSpec((te, Dn), lambda i: (i, 0)),      # gathered node rows
            pl.BlockSpec((te, De), lambda i: (i, 0)),      # raw edge feats
            # Resident params are tiny ((Dn+De)^2-ish), so the default double
            # buffering costs nothing; pipeline_mode=pl.Buffered(1) not needed.
            pl.BlockSpec((Dn, Dout), lambda i: (0, 0)),    # [Wn | 0]
            pl.BlockSpec((De, Dout), lambda i: (0, 0)),    # [0 | We]
            pl.BlockSpec((1, Dout), lambda i: (0, 0)),     # [bn , be]
        ],
        out_specs=pl.BlockSpec((te, Dout), lambda i: (i, 0)),
        compiler_params=pltpu.CompilerParams(
            dimension_semantics=("parallel",),             # edge tiles independent
            vmem_limit_bytes=64 * 1024 * 1024),
    )(src_node_feats, edge_feats, w_n_pad, w_e_pad, b_cat)


# --------------------------- module forward ----------------------------------
def input_initializer(src_idx, node_feats, edge_feats, params):
    """Pallas equivalent of InputInitializer.forward(bg, node_feats, edge_feats)."""
    w_n, b_n, w_e, b_e = params
    Dn, De = w_n.shape[1], w_e.shape[1]

    # copy_u gather of raw source-node features. Done with XLA's native TPU
    # gather (DMA row-gather); mode="clip" guarantees no OOB access even for
    # garbage indices.  Projection is then fused into the Pallas kernel below
    # (per-edge instead of per-node: extra MXU flops are free, and the hv
    # [N, Dn] array never exists in HBM or VMEM).
    src_nf = jnp.take(node_feats, src_idx.astype(jnp.int32), axis=0, mode="clip")

    # Pack weights block-diagonally over the concatenated output columns so the
    # kernel writes the concat with a single dense store per tile.
    w_n_pad = jnp.pad(w_n, ((0, 0), (0, De)))        # [Dn, Dn+De] = [Wn | 0]
    w_e_pad = jnp.pad(w_e, ((0, 0), (Dn, 0)))        # [De, Dn+De] = [0 | We]
    b_cat = jnp.concatenate([b_n, b_e], axis=1)      # [1, Dn+De]

    # TODO(synk): on v6e/v7x, cast activations/packed weights to bf16 (keeping
    # f32 MXU accumulation) to halve HBM traffic; kept f32 here for exact
    # parity with the f32 PyTorch reference.
    return fused_edge_init(src_nf, edge_feats, w_n_pad, w_e_pad, b_cat)


if __name__ == "__main__":
    # Small synthetic problem: 6 nodes (4 feats each), 8 edges (6 feats each).
    N, Dn = 6, 4
    E, De = 8, 6

    key = jax.random.PRNGKey(0)
    k1, k2, k3, k4, k5, k6 = jax.random.split(key, 6)

    node_feats = jax.random.normal(k1, (N, Dn), dtype=jnp.float32)
    edge_feats = jax.random.normal(k2, (E, De), dtype=jnp.float32)
    # edge source-node indices (the graph structure)
    src_idx = jnp.array([0, 1, 2, 3, 4, 5, 0, 2], dtype=jnp.int32)

    # Parameters stored pre-transposed as [D_in, D_out]; bias as [1, D_out].
    w_n = jax.random.normal(k3, (Dn, Dn), dtype=jnp.float32) * 0.1
    b_n = jax.random.normal(k4, (1, Dn), dtype=jnp.float32) * 0.1
    w_e = jax.random.normal(k5, (De, De), dtype=jnp.float32) * 0.1
    b_e = jax.random.normal(k6, (1, De), dtype=jnp.float32) * 0.1
    params = (w_n, b_n, w_e, b_e)

    fwd = jax.jit(input_initializer)
    out = jax.block_until_ready(fwd(src_idx, node_feats, edge_feats, params))

    # Pure-JAX reference check.
    hv_ref = node_feats @ w_n + b_n
    he_ref = edge_feats @ w_e + b_e
    ref = jnp.concatenate([hv_ref[src_idx], he_ref], axis=1)
    np.testing.assert_allclose(np.asarray(out), np.asarray(ref),
                               rtol=1e-5, atol=1e-5)
    assert out.shape == (E, Dn + De)

    print("KERNEL_OK")
</pallas_src>

<mosaic_0001>
module attributes {stable_mosaic.version = 11 : i64} {
  func.func @_fused_kernel(%arg0: i32, %arg1: memref<8x4xf32, #tpu.memory_space<vmem>>, %arg2: memref<8x6xf32, #tpu.memory_space<vmem>>, %arg3: memref<4x10xf32, #tpu.memory_space<vmem>>, %arg4: memref<6x10xf32, #tpu.memory_space<vmem>>, %arg5: memref<1x10xf32, #tpu.memory_space<vmem>>, %arg6: memref<8x10xf32, #tpu.memory_space<vmem>>) attributes {dimension_semantics = [#tpu.dimension_semantics<parallel>], iteration_bounds = array<i64: 1>, scalar_prefetch = 0 : i64, scratch_operands = 0 : i64, tpu.core_type = #tpu.core_type<tc>, window_params = [{transform_indices = @transform_0, window_bounds = array<i64: 8, 4>}, {transform_indices = @transform_1, window_bounds = array<i64: 8, 6>}, {pipeline_mode = #tpu.pipeline_mode<synchronous>, transform_indices = @transform_2, window_bounds = array<i64: 4, 10>}, {pipeline_mode = #tpu.pipeline_mode<synchronous>, transform_indices = @transform_3, window_bounds = array<i64: 6, 10>}, {pipeline_mode = #tpu.pipeline_mode<synchronous>, transform_indices = @transform_4, window_bounds = array<i64: 1, 10>}, {transform_indices = @transform_5, window_bounds = array<i64: 8, 10>}]} {
    %c0 = arith.constant 0 : index
    %c0_0 = arith.constant 0 : index
    %0 = vector.load %arg1[%c0, %c0_0] : memref<8x4xf32, #tpu.memory_space<vmem>>, vector<8x4xf32>
    %c0_1 = arith.constant 0 : index
    %c0_2 = arith.constant 0 : index
    %1 = vector.load %arg3[%c0_1, %c0_2] : memref<4x10xf32, #tpu.memory_space<vmem>>, vector<4x10xf32>
    %cst = arith.constant dense<0.000000e+00> : vector<8x10xf32>
    %2 = tpu.matmul %0, %1, %cst {dimension_numbers = #tpu.dot_dimension_numbers<[1], [0], [0], [1], [0, 0, 1, 1], [], []>} : vector<8x4xf32>, vector<4x10xf32>, vector<8x10xf32> -> vector<8x10xf32>
    %c0_3 = arith.constant 0 : index
    %c0_4 = arith.constant 0 : index
    %3 = vector.load %arg2[%c0_3, %c0_4] : memref<8x6xf32, #tpu.memory_space<vmem>>, vector<8x6xf32>
    %c0_5 = arith.constant 0 : index
    %c0_6 = arith.constant 0 : index
    %4 = vector.load %arg4[%c0_5, %c0_6] : memref<6x10xf32, #tpu.memory_space<vmem>>, vector<6x10xf32>
    %cst_7 = arith.constant dense<0.000000e+00> : vector<8x10xf32>
    %5 = tpu.matmul %3, %4, %cst_7 {dimension_numbers = #tpu.dot_dimension_numbers<[1], [0], [0], [1], [0, 0, 1, 1], [], []>} : vector<8x6xf32>, vector<6x10xf32>, vector<8x10xf32> -> vector<8x10xf32>
    %6 = arith.addf %2, %5 : vector<8x10xf32>
    %c0_8 = arith.constant 0 : index
    %c0_9 = arith.constant 0 : index
    %7 = vector.load %arg5[%c0_8, %c0_9] : memref<1x10xf32, #tpu.memory_space<vmem>>, vector<1x10xf32>
    %8 = vector.broadcast %7 : vector<1x10xf32> to vector<8x10xf32>
    %9 = arith.addf %6, %8 : vector<8x10xf32>
    %c0_10 = arith.constant 0 : index
    %c0_11 = arith.constant 0 : index
    %10 = vector.load %arg6[%c0_10, %c0_11] : memref<8x10xf32, #tpu.memory_space<vmem>>, vector<8x10xf32>
    tpu.vector_store %arg6[%c0_10, %c0_11], %9 {strides = array<i32>} : memref<8x10xf32, #tpu.memory_space<vmem>>, vector<8x10xf32>,
    return
  }
  func.func @transform_0(%arg0: i32) -> (i32, i32) {
    %c0_i32 = arith.constant 0 : i32
    %c0_i32_0 = arith.constant 0 : i32
    return %arg0, %c0_i32 : i32, i32
  }
  func.func @transform_1(%arg0: i32) -> (i32, i32) {
    %c0_i32 = arith.constant 0 : i32
    %c0_i32_0 = arith.constant 0 : i32
    return %arg0, %c0_i32 : i32, i32
  }
  func.func @transform_2(%arg0: i32) -> (i32, i32) {
    %c0_i32 = arith.constant 0 : i32
    %c0_i32_0 = arith.constant 0 : i32
    %c0_i32_1 = arith.constant 0 : i32
    return %c0_i32, %c0_i32_0 : i32, i32
  }
  func.func @transform_3(%arg0: i32) -> (i32, i32) {
    %c0_i32 = arith.constant 0 : i32
    %c0_i32_0 = arith.constant 0 : i32
    %c0_i32_1 = arith.constant 0 : i32
    return %c0_i32, %c0_i32_0 : i32, i32
  }
  func.func @transform_4(%arg0: i32) -> (i32, i32) {
    %c0_i32 = arith.constant 0 : i32
    %c0_i32_0 = arith.constant 0 : i32
    %c0_i32_1 = arith.constant 0 : i32
    return %c0_i32, %c0_i32_0 : i32, i32
  }
  func.func @transform_5(%arg0: i32) -> (i32, i32) {
    %c0_i32 = arith.constant 0 : i32
    %c0_i32_0 = arith.constant 0 : i32
    return %arg0, %c0_i32 : i32, i32
  }
}

</mosaic_0001>

<llo_original>
// kernel: input_initializer.1
$region0: #{input_initializer.1}
  #allocation0 [shape = 'u32[]', space=smem, size = 0x4, offset = 0x4, fixed_abs, tag = 'smem constant byte address 0x4 - core index']
  #allocation1 [shape = 'u32[144,128]{1,0:T(1,128)}', space=vmem, size = 0x12000, scoped, tag = 'internal scratch']
  %s0 = inlined_call_operand.hbm [shape: f32[8,4], index: 0, kind: input, shape index: {}]
  %s1 = inlined_call_operand.hbm [shape: f32[8,6], index: 1, kind: input, shape index: {}]
  %s2 = inlined_call_operand.hbm [shape: f32[4,10], index: 2, kind: input, shape index: {}]
  %s3 = inlined_call_operand.hbm [shape: f32[6,10], index: 3, kind: input, shape index: {}]
  %s4 = inlined_call_operand.hbm [shape: f32[1,10], index: 4, kind: input, shape index: {}]
  %s5 = inlined_call_operand.hbm [shape: f32[8,10], index: 5, kind: output, shape index: {}]
  %s6 = sld [smem:[#allocation0]]
  $region50: #{input_initializer.1} parent=0
    _
  %s8 = ssub.s32 1, %s6
  %s9 = scalar_select 0, %s8, %s6
  $region1: #{input_initializer.1} parent=0
    #allocation2 [shape = 'u8[4096]{0}', space=vmem, size = 0x1000, scoped, tag = 'input window, operand 0, single buffered']
    #allocation3 [shape = 's32[1]{0}', space=sflag, size = 0x4, scoped, tag = 'scoped memory for input_initializer.1']
    #allocation4 [shape = 's32[1]{0}', space=sflag, size = 0x4, scoped, tag = 'scoped memory for input_initializer.1']
    #allocation5 [shape = 'u8[4096]{0}', space=vmem, size = 0x1000, scoped, tag = 'input window, operand 1, single buffered']
    #allocation6 [shape = 's32[1]{0}', space=sflag, size = 0x4, scoped, tag = 'scoped memory for input_initializer.1']
    #allocation7 [shape = 'u8[2048]{0}', space=vmem, size = 0x800, scoped, tag = 'input window, operand 2, single buffered']
    #allocation8 [shape = 'u8[4096]{0}', space=vmem, size = 0x1000, scoped, tag = 'input window, operand 3, single buffered']
    #allocation9 [shape = 's32[1]{0}', space=sflag, size = 0x4, scoped, tag = 'scoped memory for input_initializer.1']
    #allocation10 [shape = 'u8[512]{0}', space=vmem, size = 0x400, scoped, tag = 'input window, operand 4, single buffered']
    #allocation11 [shape = 'u8[4096]{0}', space=vmem, size = 0x1000, scoped, tag = 'output window, operand 0, single buffered']
    %10 = vsyncpa [#allocation3], 0
    %11 = vsyncpa [#allocation6], 0
    %12 = vsyncpa [#allocation9], 0
    %13 = vsyncpa [#allocation4], 0
    // Predicated region
    $region2: #{input_initializer.1} parent=1 // pred_check
      _
    $region3: #{input_initializer.1} parent=1 // pred_check_branch
      %15 = sbr.rel (0) target = $region5
    $region4: #{input_initializer.1} parent=1 // pred_region
      %s17 = ssub.s32 128, 128
      %18 = vsyncadd [#allocation3], %s17
      %s20 = sshll.u32 [#allocation2], 4
      %s21 = int_to_ptr.vmem [resolvable:$true] %s20
      %23 = dma.hbm_to_vmem [thread:$0]  %s0, 128, %s21, [#allocation3]
    $region5: #{input_initializer.1} parent=1 // pred_fallthru
      _
    // Predicated region
    $region6: #{input_initializer.1} parent=1 // pred_check
      _
    $region7: #{input_initializer.1} parent=1 // pred_check_branch
      %25 = sbr.rel (0) target = $region9
    $region8: #{input_initializer.1} parent=1 // pred_region
      %s27 = ssub.s32 128, 128
      %28 = vsyncadd [#allocation6], %s27
      %s30 = sshll.u32 [#allocation5], 4
      %s31 = int_to_ptr.vmem [resolvable:$true] %s30
      %33 = dma.hbm_to_vmem [thread:$0]  %s1, 128, %s31, [#allocation6]
    $region9: #{input_initializer.1} parent=1 // pred_fallthru
      _
    // Predicated region
    $region10: #{input_initializer.1} parent=1 // pred_check
      _
    $region11: #{input_initializer.1} parent=1 // pred_check_branch
      %35 = sbr.rel (0) target = $region13
    $region12: #{input_initializer.1} parent=1 // pred_region
      %s37 = ssub.s32 64, 64
      %38 = vsyncadd [#allocation6], %s37
      %s40 = sshll.u32 [#allocation7], 4
      %s41 = int_to_ptr.vmem [resolvable:$true] %s40
      %43 = dma.hbm_to_vmem [thread:$0]  %s2, 64, %s41, [#allocation6]
    $region13: #{input_initializer.1} parent=1 // pred_fallthru
      _
    // Predicated region
    $region14: #{input_initializer.1} parent=1 // pred_check
      _
    $region15: #{input_initializer.1} parent=1 // pred_check_branch
      %45 = sbr.rel (0) target = $region17
    $region16: #{input_initializer.1} parent=1 // pred_region
      %s47 = ssub.s32 128, 128
      %48 = vsyncadd [#allocation9], %s47
      %s50 = sshll.u32 [#allocation8], 4
      %s51 = int_to_ptr.vmem [resolvable:$true] %s50
      %53 = dma.hbm_to_vmem [thread:$0]  %s3, 128, %s51, [#allocation9]
    $region17: #{input_initializer.1} parent=1 // pred_fallthru
      _
    // Predicated region
    $region18: #{input_initializer.1} parent=1 // pred_check
      _
    $region19: #{input_initializer.1} parent=1 // pred_check_branch
      %55 = sbr.rel (0) target = $region21
    $region20: #{input_initializer.1} parent=1 // pred_region
      %s57 = ssub.s32 16, 16
      %58 = vsyncadd [#allocation9], %s57
      %s60 = sshll.u32 [#allocation10], 4
      %s61 = int_to_ptr.vmem [resolvable:$true] %s60
      %63 = dma.hbm_to_vmem [thread:$0]  %s4, 16, %s61, [#allocation9]
    $region21: #{input_initializer.1} parent=1 // pred_fallthru
      _
    // Predicated region
    $region22: #{input_initializer.1} parent=1 // pred_check
      _
    $region23: #{input_initializer.1} parent=1 // pred_check_branch
      %65 = sbr.rel (0) target = $region25
    $region24: #{input_initializer.1} parent=1 // pred_region
      %66 = dma.done [#allocation3], 128
    $region25: #{input_initializer.1} parent=1 // pred_fallthru
      _
    // Predicated region
    $region26: #{input_initializer.1} parent=1 // pred_check
      _
    $region27: #{input_initializer.1} parent=1 // pred_check_branch
      %68 = sbr.rel (0) target = $region29
    $region28: #{input_initializer.1} parent=1 // pred_region
      %69 = dma.done [#allocation6], 128
    $region29: #{input_initializer.1} parent=1 // pred_fallthru
      _
    // Predicated region
    $region30: #{input_initializer.1} parent=1 // pred_check
      _
    $region31: #{input_initializer.1} parent=1 // pred_check_branch
      %71 = sbr.rel (0) target = $region33
    $region32: #{input_initializer.1} parent=1 // pred_region
      %72 = dma.done [#allocation6], 64
    $region33: #{input_initializer.1} parent=1 // pred_fallthru
      _
    // Predicated region
    $region34: #{input_initializer.1} parent=1 // pred_check
      _
    $region35: #{input_initializer.1} parent=1 // pred_check_branch
      %74 = sbr.rel (0) target = $region37
    $region36: #{input_initializer.1} parent=1 // pred_region
      %75 = dma.done [#allocation9], 128
    $region37: #{input_initializer.1} parent=1 // pred_fallthru
      _
    // Predicated region
    $region38: #{input_initializer.1} parent=1 // pred_check
      _
    $region39: #{input_initializer.1} parent=1 // pred_check_branch
      %77 = sbr.rel (0) target = $region41
    $region40: #{input_initializer.1} parent=1 // pred_region
      %78 = dma.done [#allocation9], 16
    $region41: #{input_initializer.1} parent=1 // pred_fallthru
      _
    %v79 = vld [vmem:[#allocation2] sm:$0xff]
    %v80 = vld [vmem:[#allocation7] sm:$0xf]
    %v81 = vld [vmem:[#allocation5] sm:$0xff]
    %v82 = vld [vmem:[#allocation8] sm:$0x3f]
    %vm83 = vcmask 48128
    %v85 = vsel %vm83, %v81, 0
    %vm87 = vcmask 1045504
    %v89 = vsel %vm87, %v82, 0
    %91 = vmatprep.subr.mxu0 0.0
    %92 = vmatpush1.msra.mxu0 %v89
    %93 = vmatprep.subr.mxu0 0.0
    %94 = vmatpush1.msra.mxu0 0.0
    %95 = vmatprep.subr.mxu0 0.0
    %96 = vmatpush1.msra.mxu0 0.0
    %97 = vmatprep.subr.mxu0 0.0
    %98 = vmatpush1.msra.mxu0 0.0
    %99 = vmatprep.subr.mxu0 0.0
    %100 = vmatpush1.msra.mxu0 0.0
    %101 = vmatprep.subr.mxu0 0.0
    %102 = vmatpush1.msra.mxu0 0.0
    %103 = vmatprep.subr.mxu0 0.0
    %104 = vmatpush1.msra.mxu0 0.0
    %105 = vmatprep.subr.mxu0 0.0
    %106 = vmatpush1.msra.mxu0 0.0
    %107 = vmatprep.subr.mxu0 0.0
    %108 = vmatpush1.msra.mxu0 0.0
    %109 = vmatprep.subr.mxu0 0.0
    %110 = vmatpush1.msra.mxu0 0.0
    %111 = vmatprep.subr.mxu0 0.0
    %112 = vmatpush1.msra.mxu0 0.0
    %113 = vmatprep.subr.mxu0 0.0
    %114 = vmatpush1.msra.mxu0 0.0
    %115 = vmatprep.subr.mxu0 0.0
    %116 = vmatpush1.msra.mxu0 0.0
    %117 = vmatprep.subr.mxu0 0.0
    %118 = vmatpush1.msra.mxu0 0.0
    %119 = vmatprep.subr.mxu0 0.0
    %120 = vmatpush1.msra.mxu0 0.0
    %121 = vmatprep.subr.mxu0 0.0
    %122 = vmatpush1.msra.mxu0 0.0
    %123 = vmatprep.subr.mxu0 0.0
    %124 = vmatpush1.msra.mxu0 0.0
    %125 = vmatprep.subr.mxu0 0.0
    %126 = vmatpush1.msra.mxu0 0.0
    %127 = vmatprep.subr.mxu0 0.0
    %128 = vmatpush1.msra.mxu0 0.0
    %129 = vmatprep.subr.mxu0 0.0
    %130 = vmatpush1.msra.mxu0 0.0
    %131 = vmatprep.subr.mxu0 0.0
    %132 = vmatpush1.msra.mxu0 0.0
    %133 = vmatprep.subr.mxu0 0.0
    %134 = vmatpush1.msra.mxu0 0.0
    %135 = vmatprep.subr.mxu0 0.0
    %136 = vmatpush1.msra.mxu0 0.0
    %137 = vmatprep.subr.mxu0 0.0
    %138 = vmatpush1.msra.mxu0 0.0
    %139 = vmatprep.subr.mxu0 0.0
    %140 = vmatpush1.msra.mxu0 0.0
    %141 = vmatprep.subr.mxu0 0.0
    %142 = vmatpush1.msra.mxu0 0.0
    %143 = vmatprep.subr.mxu0 0.0
    %144 = vmatpush1.msra.mxu0 0.0
    %145 = vmatprep.subr.mxu0 0.0
    %146 = vmatpush1.msra.mxu0 0.0
    %147 = vmatprep.subr.mxu0 0.0
    %148 = vmatpush1.msra.mxu0 0.0
    %149 = vmatprep.subr.mxu0 0.0
    %150 = vmatpush1.msra.mxu0 0.0
    %151 = vmatprep.subr.mxu0 0.0
    %152 = vmatpush1.msra.mxu0 0.0
    %153 = vmatprep.subr.mxu0 0.0
    %154 = vmatpush1.msra.mxu0 0.0
    %155 = vmatprep.mubr.f32.mxu0 0.0
    %156 = vmatmul.mubr.f32.gmra.mrb[0].mxu0 %v85
    %v157 = vpop.f32.mrb[0].mxu0
    %v158 = vadd.f32 0.0, %v157
    %v159 = vpop.f32.mrb[0].mxu0
    %160 = vdwg.mxu0
    %vm161 = vcmask 31744
    %v163 = vsel %vm161, %v79, 0
    %vm165 = vcmask 1043456
    %v167 = vsel %vm165, %v80, 0
    %169 = vmatprep.subr.mxu0 0.0
    %170 = vmatpush1.msra.mxu0 %v167
    %171 = vmatprep.subr.mxu0 0.0
    %172 = vmatpush1.msra.mxu0 0.0
    %173 = vmatprep.subr.mxu0 0.0
    %174 = vmatpush1.msra.mxu0 0.0
    %175 = vmatprep.subr.mxu0 0.0
    %176 = vmatpush1.msra.mxu0 0.0
    %177 = vmatprep.subr.mxu0 0.0
    %178 = vmatpush1.msra.mxu0 0.0
    %179 = vmatprep.subr.mxu0 0.0
    %180 = vmatpush1.msra.mxu0 0.0
    %181 = vmatprep.subr.mxu0 0.0
    %182 = vmatpush1.msra.mxu0 0.0
    %183 = vmatprep.subr.mxu0 0.0
    %184 = vmatpush1.msra.mxu0 0.0
    %185 = vmatprep.subr.mxu0 0.0
    %186 = vmatpush1.msra.mxu0 0.0
    %187 = vmatprep.subr.mxu0 0.0
    %188 = vmatpush1.msra.mxu0 0.0
    %189 = vmatprep.subr.mxu0 0.0
    %190 = vmatpush1.msra.mxu0 0.0
    %191 = vmatprep.subr.mxu0 0.0
    %192 = vmatpush1.msra.mxu0 0.0
    %193 = vmatprep.subr.mxu0 0.0
    %194 = vmatpush1.msra.mxu0 0.0
    %195 = vmatprep.subr.mxu0 0.0
    %196 = vmatpush1.msra.mxu0 0.0
    %197 = vmatprep.subr.mxu0 0.0
    %198 = vmatpush1.msra.mxu0 0.0
    %199 = vmatprep.subr.mxu0 0.0
    %200 = vmatpush1.msra.mxu0 0.0
    %201 = vmatprep.subr.mxu0 0.0
    %202 = vmatpush1.msra.mxu0 0.0
    %203 = vmatprep.subr.mxu0 0.0
    %204 = vmatpush1.msra.mxu0 0.0
    %205 = vmatprep.subr.mxu0 0.0
    %206 = vmatpush1.msra.mxu0 0.0
    %207 = vmatprep.subr.mxu0 0.0
    %208 = vmatpush1.msra.mxu0 0.0
    %209 = vmatprep.subr.mxu0 0.0
    %210 = vmatpush1.msra.mxu0 0.0
    %211 = vmatprep.subr.mxu0 0.0
    %212 = vmatpush1.msra.mxu0 0.0
    %213 = vmatprep.subr.mxu0 0.0
    %214 = vmatpush1.msra.mxu0 0.0
    %215 = vmatprep.subr.mxu0 0.0
    %216 = vmatpush1.msra.mxu0 0.0
    %217 = vmatprep.subr.mxu0 0.0
    %218 = vmatpush1.msra.mxu0 0.0
    %219 = vmatprep.subr.mxu0 0.0
    %220 = vmatpush1.msra.mxu0 0.0
    %221 = vmatprep.subr.mxu0 0.0
    %222 = vmatpush1.msra.mxu0 0.0
    %223 = vmatprep.subr.mxu0 0.0
    %224 = vmatpush1.msra.mxu0 0.0
    %225 = vmatprep.subr.mxu0 0.0
    %226 = vmatpush1.msra.mxu0 0.0
    %227 = vmatprep.subr.mxu0 0.0
    %228 = vmatpush1.msra.mxu0 0.0
    %229 = vmatprep.subr.mxu0 0.0
    %230 = vmatpush1.msra.mxu0 0.0
    %231 = vmatprep.subr.mxu0 0.0
    %232 = vmatpush1.msra.mxu0 0.0
    %233 = vmatprep.mubr.f32.mxu0 0.0
    %234 = vmatmul.mubr.f32.gmra.mrb[0].mxu0 %v163
    %v235 = vpop.f32.mrb[0].mxu0
    %v236 = vadd.f32 %v158, %v235
    %v237 = vpop.f32.mrb[0].mxu0
    %238 = vdwg.mxu0
    %v239 = vld [vmem:[#allocation10] sm:$0x1]
    %v241 = vlaneseq
    %v242 = vshrl.u32 %v241, 7
    %v243 = vsub.s32 0, %v242
    %v244 = vrot.slane %v239, %v243
    %v246 = vadd.f32 %v236, %v244
    %vm247 = vcmask 80896
    %248 = vst.msk [vmem:[#allocation11] sm:$0xff] %vm247, %v246
    // Predicated region
    $region42: #{input_initializer.1} parent=1 // pred_check
      _
    $region43: #{input_initializer.1} parent=1 // pred_check_branch
      %250 = sbr.rel (0) target = $region45
    $region44: #{input_initializer.1} parent=1 // pred_region
      %s252 = ssub.s32 128, 128
      %253 = vsyncadd [#allocation4], %s252
      %s255 = sshll.u32 [#allocation11], 4
      %s256 = int_to_ptr.vmem [resolvable:$true] %s255
      %258 = dma.vmem_to_hbm [thread:$0]  %s256, 128, %s5, [#allocation4]
    $region45: #{input_initializer.1} parent=1 // pred_fallthru
      _
    // Predicated region
    $region46: #{input_initializer.1} parent=1 // pred_check
      _
    $region47: #{input_initializer.1} parent=1 // pred_check_branch
      %260 = sbr.rel (0) target = $region49
    $region48: #{input_initializer.1} parent=1 // pred_region
      %261 = dma.done [#allocation4], 128
    $region49: #{input_initializer.1} parent=1 // pred_fallthru
      _
    %262 = vsyncpa [#allocation3], 1
    %263 = vsyncpa [#allocation6], 1
    %264 = vsyncpa [#allocation9], 1
    %265 = vsyncpa [#allocation4], 1

</llo_original>
